<compile_context>
chip_gen: v7x
topology: tpu7x:2x2x1
jax: 0.10.0
libtpu: 0.0.40
codegen_flags: <defaults>
</compile_context>

<pallas_src>
import functools
import math

import jax
import jax.numpy as jnp
import numpy as np
from jax import lax
from jax.experimental import pallas as pl
from jax.experimental.pallas import tpu as pltpu


def _nta_class_kernel(prob_ref, prob_s_ref, xn_ref, out_ref, *,
                      class_num, known_class_num, temperature,
                      tile_rows, num_tiles):
    C = class_num
    K = known_class_num
    N = 2 * C
    TR = tile_rows
    i = pl.program_id(0)

    inv_t = jnp.float32(1.0 / temperature)                  # static LSE max (|sim| <= 1/T)
    exp_zeroed = jnp.float32(math.exp(-1.0 / temperature))  # exp(0 - 1/T) for zeroed negatives
    inv_n = jnp.float32(1.0 / N)
    inv_sqrt_t = jnp.float32(1.0 / math.sqrt(temperature))
    eps2 = jnp.float32(1e-16)                                # == (1e-8)^2

    # Pre-normalized activations (computed once in the wrapper):
    #   xn[:, c] = x[:, c] / (max(||x[:, c]||, 1e-8) * sqrt(T))
    # so the Gram of xn is cosine-similarity / T.
    xn = xn_ref[...]                                         # (B, N)
    if num_tiles == 1:
        tile_start = 0
        xnt = xn                                             # static path, no lane slice
    else:
        # tile_rows is a multiple of 128 whenever num_tiles > 1.
        tile_start = pl.multiple_of(i * TR, 128)
        xnt = xn_ref[:, pl.ds(tile_start, TR)]               # (B, TR)

    # sim[r, c] = cos(P_{tile_start+r}, P_c) / T — batch axis contracted on MXU.
    # Contraction depth is only B: this kernel is not MXU-bound.
    sim = lax.dot_general(xnt, xn, (((0,), (0,)), ((), ())),
                          preferred_element_type=jnp.float32)    # (TR, N)

    # In-kernel masks (no HBM mask streaming).
    r = tile_start + lax.broadcasted_iota(jnp.int32, (TR, N), 0)  # global row id
    c = lax.broadcasted_iota(jnp.int32, (TR, N), 1)               # column id
    rm = jnp.where(r < C, r, r - C)                               # row id mod C
    diag = c == r
    zero_neg = (c < K) & (rm < K) & (c != rm)                     # "first K-1 negatives"

    # Static-max log-sum-exp: exp args stay in [-2/T, 0]; diagonal contributes 0.
    e = jnp.exp(sim - inv_t)
    e = jnp.where(zero_neg, exp_zeroed, e)
    e = jnp.where(diag, jnp.float32(0.0), e)
    lse = jnp.log(jnp.sum(e, axis=1, keepdims=True)) + inv_t      # (TR, 1)
    partial = jnp.sum(lse, keepdims=True) * inv_n                 # (1, 1)

    out_ref[...] = jnp.broadcast_to(partial.reshape(1, 1, 1), (1, 8, 128))

    # Step 0 only: positive-pair term and the marginal-entropy regularizer.
    @pl.when(i == 0)
    def _():
        prob = prob_ref[...]                                      # (B, C)
        prob_s = prob_s_ref[...]                                  # (B, C)
        inv_p = lax.rsqrt(jnp.maximum(
            jnp.sum(prob * prob, axis=0, keepdims=True), eps2)) * inv_sqrt_t
        inv_s = lax.rsqrt(jnp.maximum(
            jnp.sum(prob_s * prob_s, axis=0, keepdims=True), eps2)) * inv_sqrt_t
        # sum_i pos_i = 2 * <Xn_p, Xn_s>  (no gather of the positive logits needed)
        pos_sum = 2.0 * jnp.sum((prob * inv_p) * (prob_s * inv_s), keepdims=True)

        mp = jnp.sum(prob, axis=0, keepdims=True)
        mp = mp / jnp.sum(mp)
        mps = jnp.sum(prob_s, axis=0, keepdims=True)
        mps = mps / jnp.sum(mps)
        reg = (jnp.sum(mp * jnp.log(jnp.maximum(mp, 1e-30)), keepdims=True)
               + jnp.sum(mps * jnp.log(jnp.maximum(mps, 1e-30)), keepdims=True)
               + jnp.float32(2.0 * math.log(C)))                  # (1, 1)

        extra = reg - pos_sum * inv_n                             # (1, 1)
        out_ref[...] += jnp.broadcast_to(extra.reshape(1, 1, 1), (1, 8, 128))


def _pick_tile_rows(B, C, N, vmem_capacity_bytes):
    """Generation-aware row tile of the (N, N) similarity matrix + VMEM limit."""
    budget = min((3 * vmem_capacity_bytes) // 4, 100 * 1024 * 1024)

    def footprint(tr):
        resident = 2 * B * N * 4 + 4 * B * C * 4   # xn (double-buffered) + prob/prob_s
        temps = 6 * tr * N * 4                     # live fused (TR, N) temporaries
        return resident + temps + 2 * 8 * 128 * 4  # + tiny output blocks

    for tr in (512, 256, 128):                     # bigger tiles -> fewer grid steps
        if N % tr == 0 and footprint(tr) <= budget:
            return tr, budget
    if N % 128 == 0:
        return 128, budget
    return N, budget                               # small / odd N: single block


def nta_class_loss(prob, prob_s, class_num, known_class_num, temperature):
    C = int(class_num)
    K = int(known_class_num)
    assert 0 <= K <= C, "known_class_num must satisfy 0 <= K <= class_num"
    B = prob.shape[0]
    assert prob.shape == (B, C) and prob_s.shape == (B, C)
    N = 2 * C

    prob = prob.astype(jnp.float32)
    prob_s = prob_s.astype(jnp.float32)

    # Hoisted cosine normalization (+ 1/sqrt(T)) — done ONCE, not per grid step.
    x = jnp.concatenate([prob, prob_s], axis=1)                    # (B, 2C), lane-dense
    inv = lax.rsqrt(jnp.maximum(jnp.sum(x * x, axis=0, keepdims=True),
                                jnp.float32(1e-16)))
    xn = x * (inv * jnp.float32(1.0 / math.sqrt(float(temperature))))

    try:
        vmem_capacity = pltpu.get_tpu_info().vmem_capacity_bytes
    except Exception:
        vmem_capacity = 64 * 1024 * 1024                           # v7x-safe fallback
    tile_rows, vmem_limit = _pick_tile_rows(B, C, N, vmem_capacity)
    num_tiles = N // tile_rows

    kernel = functools.partial(
        _nta_class_kernel, class_num=C, known_class_num=K,
        temperature=float(temperature), tile_rows=tile_rows, num_tiles=num_tiles)

    out = pl.pallas_call(
        kernel,
        out_shape=jax.ShapeDtypeStruct((num_tiles, 8, 128), jnp.float32),
        grid_spec=pltpu.PrefetchScalarGridSpec(
            num_scalar_prefetch=0,
            grid=(num_tiles,),
            in_specs=[
                pl.BlockSpec((B, C), lambda i: (0, 0)),    # prob    (step 0 only)
                pl.BlockSpec((B, C), lambda i: (0, 0)),    # prob_s  (step 0 only)
                pl.BlockSpec((B, N), lambda i: (0, 0)),    # xn: resident Gram operand
            ],
            out_specs=pl.BlockSpec((1, 8, 128), lambda i: (i, 0, 0)),
        ),
        compiler_params=pltpu.CompilerParams(
            dimension_semantics=("parallel",),
            vmem_limit_bytes=int(vmem_limit)),
        # TODO(synk): for N too large for the (B, N) xn block to stay resident in
        # VMEM, add a second (column) grid axis with running partial sum-exp
        # accumulation per row tile.
    )(prob, prob_s, xn)
    return jnp.sum(out[:, 0, 0])


def _reference_loss(prob, prob_s, class_num, known_class_num, temperature):
    """NumPy mirror of the PyTorch forward (float64) for verification."""
    prob = np.asarray(prob, np.float64)
    prob_s = np.asarray(prob_s, np.float64)
    C, K = class_num, known_class_num
    N = 2 * C
    P = np.concatenate([prob.T, prob_s.T], axis=0)
    n = np.maximum(np.linalg.norm(P, axis=1), 1e-8)
    sim = (P @ P.T) / (n[:, None] * n[None, :]) / temperature
    sim_i_j = np.diag(sim, C)
    sim_j_i = np.diag(sim, -C)
    pos = np.concatenate([sim_i_j, sim_j_i]).reshape(N, 1)
    mask = np.ones((N, N), dtype=bool)
    np.fill_diagonal(mask, False)
    for i in range(C):
        mask[i, C + i] = False
        mask[C + i, i] = False
    neg = sim[mask].reshape(N, -1).copy()
    neg[:K, :K - 1] = 0
    neg[C:C + K, :K - 1] = 0
    cat = np.concatenate([pos, neg], axis=1)
    m = cat.max(axis=1, keepdims=True)
    lse = np.log(np.exp(cat - m).sum(axis=1)) + m[:, 0]
    ce = (lse - cat[:, 0]).sum()
    mp = prob.sum(0)
    mp = mp / mp.sum()
    mps = prob_s.sum(0)
    mps = mps / mps.sum()
    reg = (math.log(C) + (mp * np.log(mp)).sum()
           + math.log(C) + (mps * np.log(mps)).sum())
    return ce / N + reg


if __name__ == "__main__":
    class_num = 16
    known_class_num = 8
    temperature = 0.5
    batch = 8

    key = jax.random.PRNGKey(0)
    k1, k2 = jax.random.split(key)
    logits = jax.random.normal(k1, (batch, class_num), dtype=jnp.float32)
    logits_s = jax.random.normal(k2, (batch, class_num), dtype=jnp.float32)
    prob = jax.nn.softmax(logits, axis=-1)
    prob_s = jax.nn.softmax(logits_s, axis=-1)

    loss = nta_class_loss(prob, prob_s, class_num, known_class_num, temperature)
    loss = jax.block_until_ready(loss)

    ref = _reference_loss(np.asarray(prob), np.asarray(prob_s),
                          class_num, known_class_num, temperature)
    assert np.allclose(float(loss), ref, rtol=5e-4, atol=5e-4), (float(loss), ref)
    print("KERNEL_OK")
</pallas_src>

<mosaic_0001>
module attributes {stable_mosaic.version = 11 : i64} {
  func.func @_nta_class_kernel(%arg0: i32, %arg1: memref<8x16xf32, #tpu.memory_space<vmem>>, %arg2: memref<8x16xf32, #tpu.memory_space<vmem>>, %arg3: memref<8x32xf32, #tpu.memory_space<vmem>>, %arg4: memref<1x8x128xf32, #tpu.memory_space<vmem>>) attributes {dimension_semantics = [#tpu.dimension_semantics<parallel>], iteration_bounds = array<i64: 1>, scalar_prefetch = 0 : i64, scratch_operands = 0 : i64, tpu.core_type = #tpu.core_type<tc>, window_params = [{pipeline_mode = #tpu.pipeline_mode<synchronous>, transform_indices = @transform_0, window_bounds = array<i64: 8, 16>}, {pipeline_mode = #tpu.pipeline_mode<synchronous>, transform_indices = @transform_1, window_bounds = array<i64: 8, 16>}, {pipeline_mode = #tpu.pipeline_mode<synchronous>, transform_indices = @transform_2, window_bounds = array<i64: 8, 32>}, {transform_indices = @transform_3, window_bounds = array<i64: 1, 8, 128>}]} {
    %c0 = arith.constant 0 : index
    %c0_0 = arith.constant 0 : index
    %0 = vector.load %arg3[%c0, %c0_0] : memref<8x32xf32, #tpu.memory_space<vmem>>, vector<8x32xf32>
    %cst = arith.constant dense<0.000000e+00> : vector<32x32xf32>
    %1 = tpu.matmul %0, %0, %cst {dimension_numbers = #tpu.dot_dimension_numbers<[0], [0], [1], [1], [0, 1, 1, 1], [], []>} : vector<8x32xf32>, vector<8x32xf32>, vector<32x32xf32> -> vector<32x32xf32>
    %2 = tpu.iota {dimensions = array<i32: 0>} : vector<32x32xi32>
    %c0_i32 = arith.constant 0 : i32
    %3 = vector.broadcast %c0_i32 : i32 to vector<32x32xi32>
    %4 = arith.addi %3, %2 : vector<32x32xi32>
    %5 = tpu.iota {dimensions = array<i32: 1>} : vector<32x32xi32>
    %c16_i32 = arith.constant 16 : i32
    %6 = vector.broadcast %c16_i32 : i32 to vector<32x32xi32>
    %7 = arith.cmpi slt, %4, %6 : vector<32x32xi32>
    %c16_i32_1 = arith.constant 16 : i32
    %8 = vector.broadcast %c16_i32_1 : i32 to vector<32x32xi32>
    %9 = arith.subi %4, %8 : vector<32x32xi32>
    %10 = arith.select %7, %4, %9 : vector<32x32xi1>, vector<32x32xi32>
    %11 = arith.cmpi eq, %5, %4 : vector<32x32xi32>
    %c8_i32 = arith.constant 8 : i32
    %12 = vector.broadcast %c8_i32 : i32 to vector<32x32xi32>
    %13 = arith.cmpi slt, %5, %12 : vector<32x32xi32>
    %c8_i32_2 = arith.constant 8 : i32
    %14 = vector.broadcast %c8_i32_2 : i32 to vector<32x32xi32>
    %15 = arith.cmpi slt, %10, %14 : vector<32x32xi32>
    %16 = arith.andi %13, %15 : vector<32x32xi1>
    %17 = arith.cmpi ne, %5, %10 : vector<32x32xi32>
    %18 = arith.andi %16, %17 : vector<32x32xi1>
    %cst_3 = arith.constant 2.000000e+00 : f32
    %19 = vector.broadcast %cst_3 : f32 to vector<32x32xf32>
    %20 = arith.subf %1, %19 : vector<32x32xf32>
    %21 = math.exp %20 : vector<32x32xf32>
    %cst_4 = arith.constant 0.135335281 : f32
    %22 = vector.broadcast %cst_4 : f32 to vector<32x32xf32>
    %23 = arith.select %18, %22, %21 : vector<32x32xi1>, vector<32x32xf32>
    %cst_5 = arith.constant 0.000000e+00 : f32
    %24 = vector.broadcast %cst_5 : f32 to vector<32x32xf32>
    %25 = arith.select %11, %24, %23 : vector<32x32xi1>, vector<32x32xf32>
    %cst_6 = arith.constant dense<0.000000e+00> : vector<32xf32>
    %26 = vector.multi_reduction <add>, %25, %cst_6 [1] : vector<32x32xf32> to vector<32xf32>
    %27 = vector.shape_cast %26 : vector<32xf32> to vector<32x1xf32>
    %28 = math.log %27 : vector<32x1xf32>
    %cst_7 = arith.constant 2.000000e+00 : f32
    %29 = vector.broadcast %cst_7 : f32 to vector<32x1xf32>
    %30 = arith.addf %28, %29 : vector<32x1xf32>
    %31 = vector.shape_cast %30 : vector<32x1xf32> to vector<1x32x1xf32>
    %cst_8 = arith.constant dense<0.000000e+00> : vector<1xf32>
    %32 = vector.multi_reduction <add>, %31, %cst_8 [1, 2] : vector<1x32x1xf32> to vector<1xf32>
    %33 = vector.shape_cast %32 : vector<1xf32> to vector<1x1x1xf32>
    %34 = vector.extract %33[0, 0, 0] : f32 from vector<1x1x1xf32>
    %35 = vector.broadcast %34 : f32 to vector<1x1xf32>
    %cst_9 = arith.constant 3.125000e-02 : f32
    %36 = vector.broadcast %cst_9 : f32 to vector<1x1xf32>
    %37 = arith.mulf %35, %36 : vector<1x1xf32>
    %38 = vector.shape_cast %37 : vector<1x1xf32> to vector<1x1x1xf32>
    %39 = vector.shape_cast %38 : vector<1x1x1xf32> to vector<1x1x1xf32>
    %40 = vector.broadcast %39 : vector<1x1x1xf32> to vector<1x8x128xf32>
    %c0_10 = arith.constant 0 : index
    %c0_11 = arith.constant 0 : index
    %c0_12 = arith.constant 0 : index
    %41 = vector.load %arg4[%c0_10, %c0_11, %c0_12] : memref<1x8x128xf32, #tpu.memory_space<vmem>>, vector<1x8x128xf32>
    tpu.vector_store %arg4[%c0_10, %c0_11, %c0_12], %40 {strides = array<i32>} : memref<1x8x128xf32, #tpu.memory_space<vmem>>, vector<1x8x128xf32>,
    %c0_i32_13 = arith.constant 0 : i32
    %42 = arith.cmpi eq, %arg0, %c0_i32_13 : i32
    %43 = arith.extui %42 : i1 to i32
    %cst_14 = arith.constant 1.000000e-16 : f32
    %cst_15 = arith.constant 1.41421354 : f32
    %cst_16 = arith.constant 3.125000e-02 : f32
    %c0_i32_17 = arith.constant 0 : i32
    %44 = arith.cmpi ne, %43, %c0_i32_17 : i32
    scf.if %44 {
      %c0_18 = arith.constant 0 : index
      %c0_19 = arith.constant 0 : index
      %45 = vector.load %arg1[%c0_18, %c0_19] : memref<8x16xf32, #tpu.memory_space<vmem>>, vector<8x16xf32>
      %c0_20 = arith.constant 0 : index
      %c0_21 = arith.constant 0 : index
      %46 = vector.load %arg2[%c0_20, %c0_21] : memref<8x16xf32, #tpu.memory_space<vmem>>, vector<8x16xf32>
      %47 = arith.mulf %45, %45 : vector<8x16xf32>
      %cst_22 = arith.constant dense<0.000000e+00> : vector<16xf32>
      %48 = vector.multi_reduction <add>, %47, %cst_22 [0] : vector<8x16xf32> to vector<16xf32>
      %49 = vector.shape_cast %48 : vector<16xf32> to vector<1x16xf32>
      %50 = vector.broadcast %cst_14 : f32 to vector<1x16xf32>
      %51 = arith.maximumf %49, %50 : vector<1x16xf32>
      %52 = math.rsqrt %51 : vector<1x16xf32>
      %53 = vector.broadcast %cst_15 : f32 to vector<1x16xf32>
      %54 = arith.mulf %52, %53 : vector<1x16xf32>
      %55 = arith.mulf %46, %46 : vector<8x16xf32>
      %cst_23 = arith.constant dense<0.000000e+00> : vector<16xf32>
      %56 = vector.multi_reduction <add>, %55, %cst_23 [0] : vector<8x16xf32> to vector<16xf32>
      %57 = vector.shape_cast %56 : vector<16xf32> to vector<1x16xf32>
      %58 = vector.broadcast %cst_14 : f32 to vector<1x16xf32>
      %59 = arith.maximumf %57, %58 : vector<1x16xf32>
      %60 = math.rsqrt %59 : vector<1x16xf32>
      %61 = vector.broadcast %cst_15 : f32 to vector<1x16xf32>
      %62 = arith.mulf %60, %61 : vector<1x16xf32>
      %63 = vector.broadcast %54 : vector<1x16xf32> to vector<8x16xf32>
      %64 = arith.mulf %45, %63 : vector<8x16xf32>
      %65 = vector.broadcast %62 : vector<1x16xf32> to vector<8x16xf32>
      %66 = arith.mulf %46, %65 : vector<8x16xf32>
      %67 = arith.mulf %64, %66 : vector<8x16xf32>
      %68 = vector.shape_cast %67 : vector<8x16xf32> to vector<1x8x16xf32>
      %cst_24 = arith.constant dense<0.000000e+00> : vector<1xf32>
      %69 = vector.multi_reduction <add>, %68, %cst_24 [1, 2] : vector<1x8x16xf32> to vector<1xf32>
      %70 = vector.shape_cast %69 : vector<1xf32> to vector<1x1x1xf32>
      %71 = vector.extract %70[0, 0, 0] : f32 from vector<1x1x1xf32>
      %72 = vector.broadcast %71 : f32 to vector<1x1xf32>
      %cst_25 = arith.constant 2.000000e+00 : f32
      %73 = vector.broadcast %cst_25 : f32 to vector<1x1xf32>
      %74 = arith.mulf %73, %72 : vector<1x1xf32>
      %cst_26 = arith.constant dense<0.000000e+00> : vector<16xf32>
      %75 = vector.multi_reduction <add>, %45, %cst_26 [0] : vector<8x16xf32> to vector<16xf32>
      %76 = vector.shape_cast %75 : vector<16xf32> to vector<1x16xf32>
      %77 = vector.shape_cast %76 : vector<1x16xf32> to vector<1x1x16xf32>
      %cst_27 = arith.constant dense<0.000000e+00> : vector<1xf32>
      %78 = vector.multi_reduction <add>, %77, %cst_27 [1, 2] : vector<1x1x16xf32> to vector<1xf32>
      %79 = vector.shape_cast %78 : vector<1xf32> to vector<1x1x1xf32>
      %80 = vector.extract %79[0, 0, 0] : f32 from vector<1x1x1xf32>
      %81 = vector.broadcast %80 : f32 to vector<1x16xf32>
      %82 = arith.divf %76, %81 : vector<1x16xf32>
      %cst_28 = arith.constant dense<0.000000e+00> : vector<16xf32>
      %83 = vector.multi_reduction <add>, %46, %cst_28 [0] : vector<8x16xf32> to vector<16xf32>
      %84 = vector.shape_cast %83 : vector<16xf32> to vector<1x16xf32>
      %85 = vector.shape_cast %84 : vector<1x16xf32> to vector<1x1x16xf32>
      %cst_29 = arith.constant dense<0.000000e+00> : vector<1xf32>
      %86 = vector.multi_reduction <add>, %85, %cst_29 [1, 2] : vector<1x1x16xf32> to vector<1xf32>
      %87 = vector.shape_cast %86 : vector<1xf32> to vector<1x1x1xf32>
      %88 = vector.extract %87[0, 0, 0] : f32 from vector<1x1x1xf32>
      %89 = vector.broadcast %88 : f32 to vector<1x16xf32>
      %90 = arith.divf %84, %89 : vector<1x16xf32>
      %cst_30 = arith.constant 1.000000e-30 : f32
      %91 = vector.broadcast %cst_30 : f32 to vector<1x16xf32>
      %92 = arith.maximumf %82, %91 : vector<1x16xf32>
      %93 = math.log %92 : vector<1x16xf32>
      %94 = arith.mulf %82, %93 : vector<1x16xf32>
      %95 = vector.shape_cast %94 : vector<1x16xf32> to vector<1x1x16xf32>
      %cst_31 = arith.constant dense<0.000000e+00> : vector<1xf32>
      %96 = vector.multi_reduction <add>, %95, %cst_31 [1, 2] : vector<1x1x16xf32> to vector<1xf32>
      %97 = vector.shape_cast %96 : vector<1xf32> to vector<1x1x1xf32>
      %98 = vector.extract %97[0, 0, 0] : f32 from vector<1x1x1xf32>
      %99 = vector.broadcast %98 : f32 to vector<1x1xf32>
      %cst_32 = arith.constant 1.000000e-30 : f32
      %100 = vector.broadcast %cst_32 : f32 to vector<1x16xf32>
      %101 = arith.maximumf %90, %100 : vector<1x16xf32>
      %102 = math.log %101 : vector<1x16xf32>
      %103 = arith.mulf %90, %102 : vector<1x16xf32>
      %104 = vector.shape_cast %103 : vector<1x16xf32> to vector<1x1x16xf32>
      %cst_33 = arith.constant dense<0.000000e+00> : vector<1xf32>
      %105 = vector.multi_reduction <add>, %104, %cst_33 [1, 2] : vector<1x1x16xf32> to vector<1xf32>
      %106 = vector.shape_cast %105 : vector<1xf32> to vector<1x1x1xf32>
      %107 = vector.extract %106[0, 0, 0] : f32 from vector<1x1x1xf32>
      %108 = vector.broadcast %107 : f32 to vector<1x1xf32>
      %109 = arith.addf %99, %108 : vector<1x1xf32>
      %cst_34 = arith.constant 5.54517746 : f32
      %110 = vector.broadcast %cst_34 : f32 to vector<1x1xf32>
      %111 = arith.addf %109, %110 : vector<1x1xf32>
      %112 = vector.broadcast %cst_16 : f32 to vector<1x1xf32>
      %113 = arith.mulf %74, %112 : vector<1x1xf32>
      %114 = arith.subf %111, %113 : vector<1x1xf32>
      %c0_35 = arith.constant 0 : index
      %c0_36 = arith.constant 0 : index
      %c0_37 = arith.constant 0 : index
      %115 = vector.load %arg4[%c0_35, %c0_36, %c0_37] : memref<1x8x128xf32, #tpu.memory_space<vmem>>, vector<1x8x128xf32>
      %116 = vector.shape_cast %114 : vector<1x1xf32> to vector<1x1x1xf32>
      %117 = vector.shape_cast %116 : vector<1x1x1xf32> to vector<1x1x1xf32>
      %118 = vector.broadcast %117 : vector<1x1x1xf32> to vector<1x8x128xf32>
      %119 = arith.addf %115, %118 : vector<1x8x128xf32>
      %c0_38 = arith.constant 0 : index
      %c0_39 = arith.constant 0 : index
      %c0_40 = arith.constant 0 : index
      %120 = vector.load %arg4[%c0_38, %c0_39, %c0_40] : memref<1x8x128xf32, #tpu.memory_space<vmem>>, vector<1x8x128xf32>
      tpu.vector_store %arg4[%c0_38, %c0_39, %c0_40], %119 {strides = array<i32>} : memref<1x8x128xf32, #tpu.memory_space<vmem>>, vector<1x8x128xf32>,
    } else {
    }
    return
  }
  func.func @transform_0(%arg0: i32) -> (i32, i32) {
    %c0_i32 = arith.constant 0 : i32
    %c0_i32_0 = arith.constant 0 : i32
    %c0_i32_1 = arith.constant 0 : i32
    return %c0_i32, %c0_i32_0 : i32, i32
  }
  func.func @transform_1(%arg0: i32) -> (i32, i32) {
    %c0_i32 = arith.constant 0 : i32
    %c0_i32_0 = arith.constant 0 : i32
    %c0_i32_1 = arith.constant 0 : i32
    return %c0_i32, %c0_i32_0 : i32, i32
  }
  func.func @transform_2(%arg0: i32) -> (i32, i32) {
    %c0_i32 = arith.constant 0 : i32
    %c0_i32_0 = arith.constant 0 : i32
    %c0_i32_1 = arith.constant 0 : i32
    return %c0_i32, %c0_i32_0 : i32, i32
  }
  func.func @transform_3(%arg0: i32) -> (i32, i32, i32) {
    %c0_i32 = arith.constant 0 : i32
    %c0_i32_0 = arith.constant 0 : i32
    %c0_i32_1 = arith.constant 0 : i32
    return %arg0, %c0_i32, %c0_i32_0 : i32, i32, i32
  }
}

</mosaic_0001>

<llo_original>
// kernel: tpu_custom_call.1
$region0: #{tpu_custom_call.1}
  #allocation0 [shape = 'u32[]', space=smem, size = 0x4, offset = 0x4, fixed_abs, tag = 'smem constant byte address 0x4 - core index']
  #allocation1 [shape = 'u32[144,128]{1,0:T(1,128)}', space=vmem, size = 0x12000, scoped, tag = 'internal scratch']
  %s0 = inlined_call_operand.hbm [shape: f32[8,16], index: 0, kind: input, shape index: {}]
  %s1 = inlined_call_operand.hbm [shape: f32[8,16], index: 1, kind: input, shape index: {}]
  %s2 = inlined_call_operand.hbm [shape: f32[8,32], index: 2, kind: input, shape index: {}]
  %s3 = inlined_call_operand.hbm [shape: f32[1,8,128], index: 3, kind: output, shape index: {}]
  %s4 = sld [smem:[#allocation0]]
  $region38: #{tpu_custom_call.1} parent=0
    _
  %s6 = ssub.s32 1, %s4
  %s7 = scalar_select 0, %s6, %s4
  $region1: #{tpu_custom_call.1} parent=0
    #allocation2 [shape = 'u8[4096]{0}', space=vmem, size = 0x1000, scoped, tag = 'input window, operand 0, single buffered']
    #allocation3 [shape = 's32[1]{0}', space=sflag, size = 0x4, scoped, tag = 'scoped memory for tpu_custom_call.1']
    #allocation4 [shape = 's32[1]{0}', space=sflag, size = 0x4, scoped, tag = 'scoped memory for tpu_custom_call.1']
    #allocation5 [shape = 'u8[4096]{0}', space=vmem, size = 0x1000, scoped, tag = 'input window, operand 1, single buffered']
    #allocation6 [shape = 's32[1]{0}', space=sflag, size = 0x4, scoped, tag = 'scoped memory for tpu_custom_call.1']
    #allocation7 [shape = 'u8[4096]{0}', space=vmem, size = 0x1000, scoped, tag = 'input window, operand 2, single buffered']
    #allocation8 [shape = 'u8[4096]{0}', space=vmem, size = 0x1000, scoped, tag = 'output window, operand 0, single buffered']
    %8 = vsyncpa [#allocation3], 0
    %9 = vsyncpa [#allocation6], 0
    %10 = vsyncpa [#allocation4], 0
    // Predicated region
    $region2: #{tpu_custom_call.1} parent=1 // pred_check
      _
    $region3: #{tpu_custom_call.1} parent=1 // pred_check_branch
      %12 = sbr.rel (0) target = $region5
    $region4: #{tpu_custom_call.1} parent=1 // pred_region
      %s14 = ssub.s32 128, 128
      %15 = vsyncadd [#allocation3], %s14
      %s17 = sshll.u32 [#allocation2], 4
      %s18 = int_to_ptr.vmem [resolvable:$true] %s17
      %20 = dma.hbm_to_vmem [thread:$0]  %s0, 128, %s18, [#allocation3]
    $region5: #{tpu_custom_call.1} parent=1 // pred_fallthru
      _
    // Predicated region
    $region6: #{tpu_custom_call.1} parent=1 // pred_check
      _
    $region7: #{tpu_custom_call.1} parent=1 // pred_check_branch
      %22 = sbr.rel (0) target = $region9
    $region8: #{tpu_custom_call.1} parent=1 // pred_region
      %s24 = ssub.s32 128, 128
      %25 = vsyncadd [#allocation6], %s24
      %s27 = sshll.u32 [#allocation5], 4
      %s28 = int_to_ptr.vmem [resolvable:$true] %s27
      %30 = dma.hbm_to_vmem [thread:$0]  %s1, 128, %s28, [#allocation6]
    $region9: #{tpu_custom_call.1} parent=1 // pred_fallthru
      _
    // Predicated region
    $region10: #{tpu_custom_call.1} parent=1 // pred_check
      _
    $region11: #{tpu_custom_call.1} parent=1 // pred_check_branch
      %32 = sbr.rel (0) target = $region13
    $region12: #{tpu_custom_call.1} parent=1 // pred_region
      %s34 = ssub.s32 128, 128
      %35 = vsyncadd [#allocation6], %s34
      %s37 = sshll.u32 [#allocation7], 4
      %s38 = int_to_ptr.vmem [resolvable:$true] %s37
      %40 = dma.hbm_to_vmem [thread:$0]  %s2, 128, %s38, [#allocation6]
    $region13: #{tpu_custom_call.1} parent=1 // pred_fallthru
      _
    // Predicated region
    $region14: #{tpu_custom_call.1} parent=1 // pred_check
      _
    $region15: #{tpu_custom_call.1} parent=1 // pred_check_branch
      %42 = sbr.rel (0) target = $region17
    $region16: #{tpu_custom_call.1} parent=1 // pred_region
      %43 = dma.done [#allocation3], 128
    $region17: #{tpu_custom_call.1} parent=1 // pred_fallthru
      _
    // Predicated region
    $region18: #{tpu_custom_call.1} parent=1 // pred_check
      _
    $region19: #{tpu_custom_call.1} parent=1 // pred_check_branch
      %45 = sbr.rel (0) target = $region21
    $region20: #{tpu_custom_call.1} parent=1 // pred_region
      %46 = dma.done [#allocation6], 128
    $region21: #{tpu_custom_call.1} parent=1 // pred_fallthru
      _
    // Predicated region
    $region22: #{tpu_custom_call.1} parent=1 // pred_check
      _
    $region23: #{tpu_custom_call.1} parent=1 // pred_check_branch
      %48 = sbr.rel (0) target = $region25
    $region24: #{tpu_custom_call.1} parent=1 // pred_region
      %49 = dma.done [#allocation6], 128
    $region25: #{tpu_custom_call.1} parent=1 // pred_fallthru
      _
    %v50 = vld [vmem:[#allocation7] sm:$0xff]
    %51 = vxpose.xlu0.b32.start [1/16] %v50, 128
    %52 = vxpose.xlu0.b32.cont [2/16] 0.0, 128
    %53 = vxpose.xlu0.b32.cont [3/16] 0.0, 128
    %54 = vxpose.xlu0.b32.cont [4/16] 0.0, 128
    %55 = vxpose.xlu0.b32.cont [5/16] 0.0, 128
    %56 = vxpose.xlu0.b32.cont [6/16] 0.0, 128
    %57 = vxpose.xlu0.b32.cont [7/16] 0.0, 128
    %58 = vxpose.xlu0.b32.cont [8/16] 0.0, 128
    %59 = vxpose.xlu0.b32.cont [9/16] 0.0, 128
    %60 = vxpose.xlu0.b32.cont [10/16] 0.0, 128
    %61 = vxpose.xlu0.b32.cont [11/16] 0.0, 128
    %62 = vxpose.xlu0.b32.cont [12/16] 0.0, 128
    %63 = vxpose.xlu0.b32.cont [13/16] 0.0, 128
    %64 = vxpose.xlu0.b32.cont [14/16] 0.0, 128
    %65 = vxpose.xlu0.b32.cont [15/16] 0.0, 128
    %66 = vxpose.xlu0.b32.end [16/16] 0.0, 128
    %v67 = vpop.trf.xlu0
    %v68 = vpop.trf.xlu0
    %v69 = vpop.trf.xlu0
    %v70 = vpop.trf.xlu0
    %v71 = vpop.trf.xlu0
    %v72 = vpop.trf.xlu0
    %v73 = vpop.trf.xlu0
    %v74 = vpop.trf.xlu0
    %v75 = vpop.trf.xlu0
    %v76 = vpop.trf.xlu0
    %v77 = vpop.trf.xlu0
    %v78 = vpop.trf.xlu0
    %v79 = vpop.trf.xlu0
    %v80 = vpop.trf.xlu0
    %v81 = vpop.trf.xlu0
    %v82 = vpop.trf.xlu0
    %vm83 = vcmask 64512
    %v85 = vsel %vm83, %v67, 0
    %v88 = vsel %vm83, %v68, 0
    %v91 = vsel %vm83, %v69, 0
    %v94 = vsel %vm83, %v70, 0
    %96 = vmatprep.subr.mxu0 0.0
    %97 = vmatpush1.msra.mxu0 %v50
    %98 = vmatprep.subr.mxu0 0.0
    %99 = vmatpush1.msra.mxu0 0.0
    %100 = vmatprep.subr.mxu0 0.0
    %101 = vmatpush1.msra.mxu0 0.0
    %102 = vmatprep.subr.mxu0 0.0
    %103 = vmatpush1.msra.mxu0 0.0
    %104 = vmatprep.subr.mxu0 0.0
    %105 = vmatpush1.msra.mxu0 0.0
    %106 = vmatprep.subr.mxu0 0.0
    %107 = vmatpush1.msra.mxu0 0.0
    %108 = vmatprep.subr.mxu0 0.0
    %109 = vmatpush1.msra.mxu0 0.0
    %110 = vmatprep.subr.mxu0 0.0
    %111 = vmatpush1.msra.mxu0 0.0
    %112 = vmatprep.subr.mxu0 0.0
    %113 = vmatpush1.msra.mxu0 0.0
    %114 = vmatprep.subr.mxu0 0.0
    %115 = vmatpush1.msra.mxu0 0.0
    %116 = vmatprep.subr.mxu0 0.0
    %117 = vmatpush1.msra.mxu0 0.0
    %118 = vmatprep.subr.mxu0 0.0
    %119 = vmatpush1.msra.mxu0 0.0
    %120 = vmatprep.subr.mxu0 0.0
    %121 = vmatpush1.msra.mxu0 0.0
    %122 = vmatprep.subr.mxu0 0.0
    %123 = vmatpush1.msra.mxu0 0.0
    %124 = vmatprep.subr.mxu0 0.0
    %125 = vmatpush1.msra.mxu0 0.0
    %126 = vmatprep.subr.mxu0 0.0
    %127 = vmatpush1.msra.mxu0 0.0
    %128 = vmatprep.subr.mxu0 0.0
    %129 = vmatpush1.msra.mxu0 0.0
    %130 = vmatprep.subr.mxu0 0.0
    %131 = vmatpush1.msra.mxu0 0.0
    %132 = vmatprep.subr.mxu0 0.0
    %133 = vmatpush1.msra.mxu0 0.0
    %134 = vmatprep.subr.mxu0 0.0
    %135 = vmatpush1.msra.mxu0 0.0
    %136 = vmatprep.subr.mxu0 0.0
    %137 = vmatpush1.msra.mxu0 0.0
    %138 = vmatprep.subr.mxu0 0.0
    %139 = vmatpush1.msra.mxu0 0.0
    %140 = vmatprep.subr.mxu0 0.0
    %141 = vmatpush1.msra.mxu0 0.0
    %142 = vmatprep.subr.mxu0 0.0
    %143 = vmatpush1.msra.mxu0 0.0
    %144 = vmatprep.subr.mxu0 0.0
    %145 = vmatpush1.msra.mxu0 0.0
    %146 = vmatprep.subr.mxu0 0.0
    %147 = vmatpush1.msra.mxu0 0.0
    %148 = vmatprep.subr.mxu0 0.0
    %149 = vmatpush1.msra.mxu0 0.0
    %150 = vmatprep.subr.mxu0 0.0
    %151 = vmatpush1.msra.mxu0 0.0
    %152 = vmatprep.subr.mxu0 0.0
    %153 = vmatpush1.msra.mxu0 0.0
    %154 = vmatprep.subr.mxu0 0.0
    %155 = vmatpush1.msra.mxu0 0.0
    %156 = vmatprep.subr.mxu0 0.0
    %157 = vmatpush1.msra.mxu0 0.0
    %158 = vmatprep.subr.mxu0 0.0
    %159 = vmatpush1.msra.mxu0 0.0
    %160 = vmatprep.mubr.f32.mxu0 0.0
    %161 = vmatmul.mubr.f32.gmra.mrb[0].mxu0 %v85
    %v162 = vpop.f32.mrb[0].mxu0
    %v163 = vadd.f32 0.0, %v162
    %v164 = vpop.f32.mrb[0].mxu0
    %165 = vmatprep.mubr.f32.mxu0 0.0
    %166 = vmatmul.mubr.f32.gmra.mrb[0].mxu0 %v88
    %v167 = vpop.f32.mrb[0].mxu0
    %v168 = vadd.f32 0.0, %v167
    %v169 = vpop.f32.mrb[0].mxu0
    %170 = vmatprep.mubr.f32.mxu0 0.0
    %171 = vmatmul.mubr.f32.gmra.mrb[0].mxu0 %v91
    %v172 = vpop.f32.mrb[0].mxu0
    %v173 = vadd.f32 0.0, %v172
    %v174 = vpop.f32.mrb[0].mxu0
    %175 = vmatprep.mubr.f32.mxu0 0.0
    %176 = vmatmul.mubr.f32.gmra.mrb[0].mxu0 %v94
    %v177 = vpop.f32.mrb[0].mxu0
    %v178 = vadd.f32 0.0, %v177
    %v179 = vpop.f32.mrb[0].mxu0
    %180 = vdwg.mxu0
    %v181 = vlaneseq
    %v182 = vshrl.u32 %v181, 7
    %v183 = vadd.s32 %v182, 8
    %v184 = vadd.s32 %v182, 16
    %v185 = vadd.s32 %v182, 24
    %v186 = vlaneseq
    %v187 = vand.u32 %v186, 127
    %vm188 = vcmp.lt.s32.totalorder %v182, 16
    %vm189 = vcmp.lt.s32.totalorder %v183, 16
    %vm190 = vcmp.lt.s32.totalorder %v184, 16
    %vm191 = vcmp.lt.s32.totalorder %v185, 16
    %v192 = vsub.s32 %v182, 16
    %v193 = vsub.s32 %v183, 16
    %v194 = vsub.s32 %v185, 16
    %v195 = vsel %vm188, %v182, %v192
    %v196 = vsel %vm189, %v183, %v193
    %v197 = vsel %vm190, %v184, %v182
    %v198 = vsel %vm191, %v185, %v194
    %vm199 = vcmp.eq.s32.totalorder %v187, %v182
    %vm200 = vcmp.eq.s32.totalorder %v187, %v183
    %vm201 = vcmp.eq.s32.totalorder %v187, %v184
    %vm202 = vcmp.eq.s32.totalorder %v187, %v185
    %vm203 = vcmp.lt.s32.totalorder %v187, 8
    %vm204 = vcmp.lt.s32.totalorder %v195, 8
    %vm205 = vcmp.lt.s32.totalorder %v196, 8
    %vm206 = vcmp.lt.s32.totalorder %v197, 8
    %vm207 = vcmp.lt.s32.totalorder %v198, 8
    %vm208 = vmand %vm203, %vm204
    %vm209 = vmand %vm203, %vm205
    %vm210 = vmand %vm203, %vm206
    %vm211 = vmand %vm203, %vm207
    %vm212 = vcmp.ne.s32.totalorder %v187, %v195
    %vm213 = vcmp.ne.s32.totalorder %v187, %v196
    %vm214 = vcmp.ne.s32.totalorder %v187, %v197
    %vm215 = vcmp.ne.s32.totalorder %v187, %v198
    %vm216 = vmand %vm208, %vm212
    %vm217 = vmand %vm209, %vm213
    %vm218 = vmand %vm210, %vm214
    %vm219 = vmand %vm211, %vm215
    %v220 = vsub.f32 %v163, 2.0
    %v221 = vsub.f32 %v168, 2.0
    %v222 = vsub.f32 %v173, 2.0
    %v223 = vsub.f32 %v178, 2.0
    %v224 = vmul.f32 %v220, 1.442695
    %v225 = vpow.pop %v224
    %v226 = vmul.f32 %v221, 1.442695
    %v227 = vpow.pop %v226
    %v228 = vmul.f32 %v222, 1.442695
    %v229 = vpow.pop %v228
    %v230 = vmul.f32 %v223, 1.442695
    %v231 = vpow.pop %v230
    %v232 = vsel %vm216, 0.13533528, %v225
    %v233 = vsel %vm217, 0.13533528, %v227
    %v234 = vsel %vm218, 0.13533528, %v229
    %v235 = vsel %vm219, 0.13533528, %v231
    %v236 = vsel %vm199, 0.0, %v232
    %v237 = vsel %vm200, 0.0, %v233
    %v238 = vsel %vm201, 0.0, %v234
    %v239 = vsel %vm202, 0.0, %v235
    %vm240 = vcmask 261120
    %v241 = vsel %vm240, %v236, 0.0
    %242 = vadd.xlane.f32.xlu0 %v241
    %v243 = vpop.xlane.xlu0 %242
    %v244 = vsel %vm240, %v237, 0.0
    %245 = vadd.xlane.f32.xlu0 %v244
    %v246 = vpop.xlane.xlu0 %245
    %v247 = vsel %vm240, %v238, 0.0
    %248 = vadd.xlane.f32.xlu0 %v247
    %v249 = vpop.xlane.xlu0 %248
    %v250 = vsel %vm240, %v239, 0.0
    %251 = vadd.xlane.f32.xlu0 %v250
    %v252 = vpop.xlane.xlu0 %251
    %v253 = vlog2.pop %v243
    %v254 = vmul.f32 %v253, 0.6931472
    %v255 = vlog2.pop %v246
    %v256 = vmul.f32 %v255, 0.6931472
    %v257 = vlog2.pop %v249
    %v258 = vmul.f32 %v257, 0.6931472
    %v259 = vlog2.pop %v252
    %v260 = vmul.f32 %v259, 0.6931472
    %v261 = vadd.f32 %v254, 2.0
    %v262 = vadd.f32 %v256, 2.0
    %v263 = vadd.f32 %v258, 2.0
    %v264 = vadd.f32 %v260, 2.0
    %vm265 = vcmask 7168
    %v266 = vsel %vm265, %v261, 0.0
    %v267 = vsel %vm265, %v262, 0.0
    %v268 = vadd.f32 %v266, %v267
    %v269 = vsel %vm265, %v263, 0.0
    %v270 = vadd.f32 %v268, %v269
    %v271 = vsel %vm265, %v264, 0.0
    %v272 = vadd.f32 %v270, %v271
    %273 = vadd.xlane.f32.xlu0 %v272
    %v274 = vpop.xlane.xlu0 %273
    %v275 = vrot.slane %v274, 4
    %v276 = vadd.f32 %v274, %v275
    %v277 = vrot.slane %v276, 2
    %v278 = vadd.f32 %v276, %v277
    %v279 = vrot.slane %v278, 1
    %v280 = vadd.f32 %v278, %v279
    %s281 = vtos %v280
    %v282 = vstv %s281
    %v283 = vmul.f32 %v282, 0.03125
    %284 = vst [vmem:[#allocation8] sm:$0xff] %v283
    %p285 = scmp.eq.s32.totalorder 0, 0
    // Predicated region
    $region26: #{tpu_custom_call.1} parent=1 // pred_check
      %p286 = pneg %p285
    $region27: #{tpu_custom_call.1} parent=1 // pred_check_branch
      %288 = sbr.rel (%p286) target = $region29
    $region28: #{tpu_custom_call.1} parent=1 // pred_region
      %v289 = vld [vmem:[#allocation2] sm:$0xff]
      %v290 = vld [vmem:[#allocation5] sm:$0xff]
      %v291 = vmul.f32 %v289, %v289
      %vm292 = vcmask 130048
      %v293 = vsel %vm292, %v291, 0.0
      %v294 = vrot.slane %v293, 4
      %v295 = vadd.f32 %v293, %v294
      %v296 = vrot.slane %v295, 2
      %v297 = vadd.f32 %v295, %v296
      %v298 = vrot.slane %v297, 1
      %v299 = vadd.f32 %v297, %v298
      %v300 = vmax.f32 %v299, 1e-16
      %v301 = vrsqrt.pop %v300
      %v302 = vmul.f32 %v301, 1.4142135
      %v303 = vmul.f32 %v290, %v290
      %v304 = vsel %vm292, %v303, 0.0
      %v305 = vrot.slane %v304, 4
      %v306 = vadd.f32 %v304, %v305
      %v307 = vrot.slane %v306, 2
      %v308 = vadd.f32 %v306, %v307
      %v309 = vrot.slane %v308, 1
      %v310 = vadd.f32 %v308, %v309
      %v311 = vmax.f32 %v310, 1e-16
      %v312 = vrsqrt.pop %v311
      %v313 = vmul.f32 %v312, 1.4142135
      %v314 = vmul.f32 %v289, %v302
      %v315 = vmul.f32 %v290, %v313
      %v316 = vmul.f32 %v314, %v315
      %v317 = vsel %vm292, %v316, 0.0
      %318 = vadd.xlane.f32.xlu0 %v317
      %v319 = vpop.xlane.xlu0 %318
      %v320 = vrot.slane %v319, 4
      %v321 = vadd.f32 %v319, %v320
      %v322 = vrot.slane %v321, 2
      %v323 = vadd.f32 %v321, %v322
      %v324 = vrot.slane %v323, 1
      %v325 = vadd.f32 %v323, %v324
      %s326 = vtos %v325
      %v327 = vstv %s326
      %v328 = vmul.f32 %v327, 2.0
      %v329 = vsel %vm292, %v289, 0.0
      %v330 = vrot.slane %v329, 4
      %v331 = vadd.f32 %v329, %v330
      %v332 = vrot.slane %v331, 2
      %v333 = vadd.f32 %v331, %v332
      %v334 = vrot.slane %v333, 1
      %v335 = vadd.f32 %v333, %v334
      %vm336 = vcmask 122880
      %v337 = vsel %vm336, %v335, 0.0
      %338 = vadd.xlane.f32.xlu0 %v337
      %v339 = vpop.xlane.xlu0 %338
      %v340 = vrot.slane %v339, 4
      %v341 = vadd.f32 %v339, %v340
      %v342 = vrot.slane %v341, 2
      %v343 = vadd.f32 %v341, %v342
      %v344 = vrot.slane %v343, 1
      %v345 = vadd.f32 %v343, %v344
      %s346 = vtos %v345
      %v347 = vstv %s346
      %v348 = vrcp.pop %v347
      %v349 = vmul.f32 %v335, %v348
      %v350 = vsel %vm292, %v290, 0.0
      %v351 = vrot.slane %v350, 4
      %v352 = vadd.f32 %v350, %v351
      %v353 = vrot.slane %v352, 2
      %v354 = vadd.f32 %v352, %v353
      %v355 = vrot.slane %v354, 1
      %v356 = vadd.f32 %v354, %v355
      %v357 = vsel %vm336, %v356, 0.0
      %358 = vadd.xlane.f32.xlu0 %v357
      %v359 = vpop.xlane.xlu0 %358
      %v360 = vrot.slane %v359, 4
      %v361 = vadd.f32 %v359, %v360
      %v362 = vrot.slane %v361, 2
      %v363 = vadd.f32 %v361, %v362
      %v364 = vrot.slane %v363, 1
      %v365 = vadd.f32 %v363, %v364
      %s366 = vtos %v365
      %v367 = vstv %s366
      %v368 = vrcp.pop %v367
      %v369 = vmul.f32 %v356, %v368
      %v370 = vmax.f32 %v349, 1e-30
      %v371 = vlog2.pop %v370
      %v372 = vmul.f32 %v371, 0.6931472
      %v373 = vmul.f32 %v349, %v372
      %v374 = vsel %vm336, %v373, 0.0
      %375 = vadd.xlane.f32.xlu0 %v374
      %v376 = vpop.xlane.xlu0 %375
      %v377 = vrot.slane %v376, 4
      %v378 = vadd.f32 %v376, %v377
      %v379 = vrot.slane %v378, 2
      %v380 = vadd.f32 %v378, %v379
      %v381 = vrot.slane %v380, 1
      %v382 = vadd.f32 %v380, %v381
      %s383 = vtos %v382
      %v384 = vstv %s383
      %v385 = vmax.f32 %v369, 1e-30
      %v386 = vlog2.pop %v385
      %v387 = vmul.f32 %v386, 0.6931472
      %v388 = vmul.f32 %v369, %v387
      %v389 = vsel %vm336, %v388, 0.0
      %390 = vadd.xlane.f32.xlu0 %v389
      %v391 = vpop.xlane.xlu0 %390
      %v392 = vrot.slane %v391, 4
      %v393 = vadd.f32 %v391, %v392
      %v394 = vrot.slane %v393, 2
      %v395 = vadd.f32 %v393, %v394
      %v396 = vrot.slane %v395, 1
      %v397 = vadd.f32 %v395, %v396
      %s398 = vtos %v397
      %v399 = vstv %s398
      %v400 = vadd.f32 %v384, %v399
      %v401 = vadd.f32 %v400, 5.5451775
      %v402 = vmul.f32 %v328, 0.03125
      %v403 = vsub.f32 %v401, %v402
      %v404 = vld [vmem:[#allocation8] sm:$0xff]
      %v405 = vadd.f32 %v404, %v403
      %406 = vst [vmem:[#allocation8] sm:$0xff] %v405
    $region29: #{tpu_custom_call.1} parent=1 // pred_fallthru
      _
    // Predicated region
    $region30: #{tpu_custom_call.1} parent=1 // pred_check
      _
    $region31: #{tpu_custom_call.1} parent=1 // pred_check_branch
      %408 = sbr.rel (0) target = $region33
    $region32: #{tpu_custom_call.1} parent=1 // pred_region
      %s410 = ssub.s32 128, 128
      %411 = vsyncadd [#allocation4], %s410
      %s413 = sshll.u32 [#allocation8], 4
      %s414 = int_to_ptr.vmem [resolvable:$true] %s413
      %416 = dma.vmem_to_hbm [thread:$0]  %s414, 128, %s3, [#allocation4]
    $region33: #{tpu_custom_call.1} parent=1 // pred_fallthru
      _
    // Predicated region
    $region34: #{tpu_custom_call.1} parent=1 // pred_check
      _
    $region35: #{tpu_custom_call.1} parent=1 // pred_check_branch
      %418 = sbr.rel (0) target = $region37
    $region36: #{tpu_custom_call.1} parent=1 // pred_region
      %419 = dma.done [#allocation4], 128
    $region37: #{tpu_custom_call.1} parent=1 // pred_fallthru
      _
    %420 = vsyncpa [#allocation3], 1
    %421 = vsyncpa [#allocation6], 1
    %422 = vsyncpa [#allocation4], 1

</llo_original>
